<compile_context>
chip_gen: v5e
topology: v5e:2x2
jax: 0.10.0
libtpu: 0.0.40
codegen_flags: <defaults>
</compile_context>

<pallas_src>
from math import ceil

import jax
import jax.numpy as jnp
from jax.experimental import pallas as pl
from jax.experimental.pallas import tpu as pltpu


def _round_up(x, m):
    return -(-x // m) * m


# ----------------------------------------------------------------------------
# Pallas kernel: fused im2col conv (all filter widths at once) + ReLU +
# max-over-time pool + Linear.  One grid step handles a (TB, L_pad, D) tile.
# ----------------------------------------------------------------------------
def kim_cnn_kernel(emb_ref, wbig_ref, bias_ref, mask_ref, fcw_ref, fcb_ref,
                   out_ref):
    emb = emb_ref[...]                                   # (TB, L_pad, D) bf16
    D = emb.shape[-1]
    L_out = mask_ref.shape[0]                            # L - min_fw + 1
    max_fw = wbig_ref.shape[0] // D

    # im2col slab, built ONCE per tile: slab[b, t, f*D + d] = emb[b, t+f, d]
    slab = jnp.concatenate(
        [emb[:, f:f + L_out, :] for f in range(max_fw)],
        axis=-1)                                         # (TB, L_out, max_fw*D)

    # Single MXU contraction for all filter widths / branches:
    # K = max_fw*D, N = Cp (lane-padded stacked channels), f32 accumulation.
    conv = jax.lax.dot_general(
        slab, wbig_ref[...],
        dimension_numbers=(((2,), (0,)), ((), ())),
        preferred_element_type=jnp.float32)              # (TB, L_out, Cp) f32

    # Mask the time positions that are out of range for the shorter filter
    # widths, then max-pool over time.  relu(max(conv)+b) == max(relu(conv+b))
    # since ReLU is monotone and the bias is time-invariant.
    pooled = jnp.max(conv + mask_ref[...], axis=1) + bias_ref[...]   # (TB, Cp)
    pooled = jnp.maximum(pooled, 0.0)

    # Final Linear: fc weights arrive pre-transposed & zero-padded -> no
    # in-kernel transpose / concat.  Dropout is identity at inference.
    out_ref[...] = (
        jnp.dot(pooled, fcw_ref[...], preferred_element_type=jnp.float32)
        + fcb_ref[...])


# ----------------------------------------------------------------------------
# Wrapper-side parameter packing (im2col weights, masks, padded FC)
# ----------------------------------------------------------------------------
def _pack_params(conv_params, fc_w, fc_b, L, max_fw, min_fw, compute_dtype):
    D = conv_params[0][0].shape[-1]
    C_total = sum(w.shape[0] for (w, _) in conv_params)
    Cp = _round_up(C_total, 128)                 # lane-dense stacked channels
    L_out = L - min_fw + 1

    w_cols, b_all, lens = [], [], []
    for (w, b) in conv_params:
        C, fw, _ = w.shape
        # zero-pad filter width to max_fw (extra taps contribute exactly 0)
        w_pad = jnp.pad(w, ((0, 0), (0, max_fw - fw), (0, 0)))   # (C, max_fw, D)
        # -> (max_fw*D, C) with row f*D+d, col c = w[c, f, d]
        w_cols.append(jnp.transpose(w_pad, (1, 2, 0)).reshape(max_fw * D, C))
        b_all.append(b.astype(jnp.float32))
        lens.append(jnp.full((C,), L - fw + 1, jnp.int32))

    w_big = jnp.concatenate(w_cols, axis=1)                      # (max_fw*D, 3C)
    w_big = jnp.pad(w_big, ((0, 0), (0, Cp - C_total))).astype(compute_dtype)

    bias = jnp.pad(jnp.concatenate(b_all), (0, Cp - C_total))
    bias = bias.reshape(1, Cp).astype(jnp.float32)

    # additive -inf mask: position t is valid for a channel iff t < L - fw + 1
    lens = jnp.pad(jnp.concatenate(lens), (0, Cp - C_total),
                   constant_values=L_out)
    t_idx = jnp.arange(L_out, dtype=jnp.int32)[:, None]          # (L_out, 1)
    neg_mask = jnp.where(t_idx < lens[None, :], 0.0, -1e30).astype(jnp.float32)

    n_cls = fc_w.shape[0]
    NCp = _round_up(n_cls, 128)                  # lane-dense output store
    fc_t = jnp.zeros((Cp, NCp), jnp.float32)
    fc_t = fc_t.at[:C_total, :n_cls].set(fc_w.T.astype(jnp.float32))
    fcb = jnp.zeros((1, NCp), jnp.float32).at[0, :n_cls].set(
        fc_b.astype(jnp.float32))
    return w_big, bias, neg_mask, fc_t, fcb, Cp, NCp, L_out


def kim_cnn_forward(inputs, params, filter_windows=(3, 4, 5),
                    compute_dtype=jnp.bfloat16, batch_tile=8):
    """inputs: (B, L) int32 token ids.  Returns (B, class_number) f32 logits."""
    emb_table, conv_params, fc_w, fc_b = params
    max_fw, min_fw = max(filter_windows), min(filter_windows)

    # Same short-sentence padding rule as the PyTorch forward (pad id 0).
    if inputs.shape[1] <= max_fw:
        pad_r = ceil((max_fw - inputs.shape[1]) / 2)
        inputs = jnp.pad(inputs, ((0, 0), (1, pad_r)))
    B, L = inputs.shape

    # TODO(synk): fuse this embedding gather into the kernel (scalar-prefetched
    # ids + manual DMA from emb_table kept in pl.ANY) to avoid the HBM
    # round-trip of the (B, L, D) activation.
    emb = jnp.take(emb_table, inputs, axis=0).astype(compute_dtype)  # (B, L, D)
    D = emb.shape[-1]

    (w_big, bias, neg_mask, fc_t, fcb, Cp, NCp, L_out) = _pack_params(
        conv_params, fc_w, fc_b, L, max_fw, min_fw, compute_dtype)

    # Tail zero rows so every width-max_fw im2col window is in bounds; the
    # extra positions are masked to -inf before pooling.
    L_pad = L_out + max_fw - 1
    emb = jnp.pad(emb, ((0, 0), (0, L_pad - L), (0, 0)))

    TB = max(1, min(batch_tile, B))
    B_pad = _round_up(B, TB)
    if B_pad != B:
        emb = jnp.pad(emb, ((0, B_pad - B), (0, 0), (0, 0)))

    full = lambda b: (0, 0)
    out = pl.pallas_call(
        kim_cnn_kernel,
        out_shape=jax.ShapeDtypeStruct((B_pad, NCp), jnp.float32),
        grid_spec=pltpu.PrefetchScalarGridSpec(
            num_scalar_prefetch=0,
            grid=(B_pad // TB,),
            in_specs=[
                pl.BlockSpec((TB, L_pad, D), lambda b: (b, 0, 0)),  # emb tile
                pl.BlockSpec((max_fw * D, Cp), full),               # stacked conv W
                pl.BlockSpec((1, Cp), full),                        # conv bias
                pl.BlockSpec((L_out, Cp), full),                    # -inf time mask
                pl.BlockSpec((Cp, NCp), full),                      # fc W (pre-T, padded)
                pl.BlockSpec((1, NCp), full),                       # fc bias
            ],
            out_specs=pl.BlockSpec((TB, NCp), lambda b: (b, 0)),
        ),
        compiler_params=pltpu.CompilerParams(
            dimension_semantics=("parallel",),       # batch tiles independent
            vmem_limit_bytes=32 * 1024 * 1024),      # fits v7x scoped budget
    )(emb, w_big, bias, neg_mask, fc_t, fcb)

    return out[:B, :fc_w.shape[0]]


# ----------------------------------------------------------------------------
# Pure-JAX reference with PyTorch Conv2d / max_pool1d / Linear semantics.
# Uses the same bf16-in / f32-accumulate convention as the kernel so the
# comparison is apples-to-apples.
# ----------------------------------------------------------------------------
def kim_cnn_reference(inputs, params, filter_windows=(3, 4, 5),
                      compute_dtype=jnp.bfloat16):
    emb_table, conv_params, fc_w, fc_b = params
    max_fw = max(filter_windows)
    if inputs.shape[1] <= max_fw:
        pad_r = ceil((max_fw - inputs.shape[1]) / 2)
        inputs = jnp.pad(inputs, ((0, 0), (1, pad_r)))
    emb = jnp.take(emb_table, inputs, axis=0).astype(compute_dtype)
    L = emb.shape[1]

    feats = []
    for (w, b) in conv_params:
        C, fw, D = w.shape
        w_c = w.astype(compute_dtype)
        conv = jnp.stack(
            [jnp.einsum('bfd,cfd->bc', emb[:, t:t + fw, :], w_c,
                        preferred_element_type=jnp.float32)
             for t in range(L - fw + 1)], axis=1)            # (B, L_out, C) f32
        feats.append(jnp.max(jax.nn.relu(conv + b[None, None, :]), axis=1))
    feats = jnp.concatenate(feats, axis=1)                   # (B, 3C)
    return feats @ fc_w.T + fc_b[None, :]


# ----------------------------------------------------------------------------
if __name__ == "__main__":
    # Small, module-consistent shapes.
    batch = 2
    seq_len = 16
    vocab_size = 50
    embedding_dim = 128
    feature_maps = 64
    class_number = 4
    filter_windows = (3, 4, 5)

    key = jax.random.PRNGKey(0)
    keys = jax.random.split(key, 10)

    # Deterministic parameter init (shapes from CNN.__init__, non-static model).
    emb_table = jax.random.normal(keys[0], (vocab_size + 2, embedding_dim),
                                  jnp.float32) * 0.1
    conv_params = []
    for i, fw in enumerate(filter_windows):
        w = jax.random.normal(keys[1 + i],
                              (feature_maps, fw, embedding_dim),
                              jnp.float32) * 0.05
        b = jax.random.normal(keys[4 + i], (feature_maps,), jnp.float32) * 0.05
        conv_params.append((w, b))
    fc_w = jax.random.normal(
        keys[7], (class_number, len(filter_windows) * feature_maps),
        jnp.float32) * 0.05
    fc_b = jax.random.normal(keys[8], (class_number,), jnp.float32) * 0.05

    params = (emb_table, conv_params, fc_w, fc_b)

    # Input token ids (B, L).
    x = jax.random.randint(keys[9], (batch, seq_len), 0, vocab_size + 2,
                           dtype=jnp.int32)

    out = kim_cnn_forward(x, params, filter_windows)
    out = jax.block_until_ready(out)

    ref = kim_cnn_reference(x, params, filter_windows)
    assert out.shape == (batch, class_number)
    assert jnp.allclose(out, ref, rtol=2e-2, atol=2e-3), (
        f"mismatch vs reference: max abs err {float(jnp.max(jnp.abs(out - ref)))}")

    print("KERNEL_OK")
</pallas_src>

<mosaic_0001>
module attributes {stable_mosaic.version = 11 : i64} {
  func.func @kim_cnn_kernel(%arg0: i32, %arg1: memref<2x18x128xbf16, #tpu.memory_space<vmem>>, %arg2: memref<640x256xbf16, #tpu.memory_space<vmem>>, %arg3: memref<1x256xf32, #tpu.memory_space<vmem>>, %arg4: memref<14x256xf32, #tpu.memory_space<vmem>>, %arg5: memref<256x128xf32, #tpu.memory_space<vmem>>, %arg6: memref<1x128xf32, #tpu.memory_space<vmem>>, %arg7: memref<2x128xf32, #tpu.memory_space<vmem>>) attributes {dimension_semantics = [#tpu.dimension_semantics<parallel>], iteration_bounds = array<i64: 1>, scalar_prefetch = 0 : i64, scratch_operands = 0 : i64, tpu.core_type = #tpu.core_type<tc>, window_params = [{transform_indices = @transform_0, window_bounds = array<i64: 2, 18, 128>}, {pipeline_mode = #tpu.pipeline_mode<synchronous>, transform_indices = @transform_1, window_bounds = array<i64: 640, 256>}, {pipeline_mode = #tpu.pipeline_mode<synchronous>, transform_indices = @transform_2, window_bounds = array<i64: 1, 256>}, {pipeline_mode = #tpu.pipeline_mode<synchronous>, transform_indices = @transform_3, window_bounds = array<i64: 14, 256>}, {pipeline_mode = #tpu.pipeline_mode<synchronous>, transform_indices = @transform_4, window_bounds = array<i64: 256, 128>}, {pipeline_mode = #tpu.pipeline_mode<synchronous>, transform_indices = @transform_5, window_bounds = array<i64: 1, 128>}, {transform_indices = @transform_6, window_bounds = array<i64: 2, 128>}]} {
    %c0 = arith.constant 0 : index
    %c0_0 = arith.constant 0 : index
    %c0_1 = arith.constant 0 : index
    %0 = vector.load %arg1[%c0, %c0_0, %c0_1] : memref<2x18x128xbf16, #tpu.memory_space<vmem>>, vector<2x18x128xbf16>
    %1 = vector.extract_strided_slice %0 {offsets = [0, 0, 0], sizes = [2, 14, 128], strides = [1, 1, 1]} : vector<2x18x128xbf16> to vector<2x14x128xbf16>
    %2 = vector.extract_strided_slice %0 {offsets = [0, 1, 0], sizes = [2, 14, 128], strides = [1, 1, 1]} : vector<2x18x128xbf16> to vector<2x14x128xbf16>
    %3 = vector.extract_strided_slice %0 {offsets = [0, 2, 0], sizes = [2, 14, 128], strides = [1, 1, 1]} : vector<2x18x128xbf16> to vector<2x14x128xbf16>
    %4 = vector.extract_strided_slice %0 {offsets = [0, 3, 0], sizes = [2, 14, 128], strides = [1, 1, 1]} : vector<2x18x128xbf16> to vector<2x14x128xbf16>
    %5 = vector.extract_strided_slice %0 {offsets = [0, 4, 0], sizes = [2, 14, 128], strides = [1, 1, 1]} : vector<2x18x128xbf16> to vector<2x14x128xbf16>
    %6 = tpu.concatenate %1, %2, %3, %4, %5 in 2 : vector<2x14x128xbf16>, vector<2x14x128xbf16>, vector<2x14x128xbf16>, vector<2x14x128xbf16>, vector<2x14x128xbf16> -> vector<2x14x640xbf16>
    %c0_2 = arith.constant 0 : index
    %c0_3 = arith.constant 0 : index
    %7 = vector.load %arg2[%c0_2, %c0_3] : memref<640x256xbf16, #tpu.memory_space<vmem>>, vector<640x256xbf16>
    %cst = arith.constant dense<0.000000e+00> : vector<2x14x256xf32>
    %8 = tpu.matmul %6, %7, %cst {dimension_numbers = #tpu.dot_dimension_numbers<[2], [0], [0, 1], [1], [0, 0, 0, 1, 1, 1], [], []>} : vector<2x14x640xbf16>, vector<640x256xbf16>, vector<2x14x256xf32> -> vector<2x14x256xf32>
    %c0_4 = arith.constant 0 : index
    %c0_5 = arith.constant 0 : index
    %9 = vector.load %arg4[%c0_4, %c0_5] : memref<14x256xf32, #tpu.memory_space<vmem>>, vector<14x256xf32>
    %10 = vector.shape_cast %9 : vector<14x256xf32> to vector<1x14x256xf32>
    %11 = vector.broadcast %10 : vector<1x14x256xf32> to vector<2x14x256xf32>
    %12 = arith.addf %8, %11 : vector<2x14x256xf32>
    %cst_6 = arith.constant dense<0xFF800000> : vector<2x256xf32>
    %13 = vector.multi_reduction <maximumf>, %12, %cst_6 [1] : vector<2x14x256xf32> to vector<2x256xf32>
    %c0_7 = arith.constant 0 : index
    %c0_8 = arith.constant 0 : index
    %14 = vector.load %arg3[%c0_7, %c0_8] : memref<1x256xf32, #tpu.memory_space<vmem>>, vector<1x256xf32>
    %15 = vector.broadcast %14 : vector<1x256xf32> to vector<2x256xf32>
    %16 = arith.addf %13, %15 : vector<2x256xf32>
    %cst_9 = arith.constant 0.000000e+00 : f32
    %17 = vector.broadcast %cst_9 : f32 to vector<2x256xf32>
    %18 = arith.maximumf %16, %17 : vector<2x256xf32>
    %c0_10 = arith.constant 0 : index
    %c0_11 = arith.constant 0 : index
    %19 = vector.load %arg5[%c0_10, %c0_11] : memref<256x128xf32, #tpu.memory_space<vmem>>, vector<256x128xf32>
    %cst_12 = arith.constant dense<0.000000e+00> : vector<2x128xf32>
    %20 = tpu.matmul %18, %19, %cst_12 {dimension_numbers = #tpu.dot_dimension_numbers<[1], [0], [0], [1], [0, 0, 1, 1], [], []>} : vector<2x256xf32>, vector<256x128xf32>, vector<2x128xf32> -> vector<2x128xf32>
    %c0_13 = arith.constant 0 : index
    %c0_14 = arith.constant 0 : index
    %21 = vector.load %arg6[%c0_13, %c0_14] : memref<1x128xf32, #tpu.memory_space<vmem>>, vector<1x128xf32>
    %22 = vector.broadcast %21 : vector<1x128xf32> to vector<2x128xf32>
    %23 = arith.addf %20, %22 : vector<2x128xf32>
    %c0_15 = arith.constant 0 : index
    %c0_16 = arith.constant 0 : index
    %24 = vector.load %arg7[%c0_15, %c0_16] : memref<2x128xf32, #tpu.memory_space<vmem>>, vector<2x128xf32>
    tpu.vector_store %arg7[%c0_15, %c0_16], %23 {strides = array<i32>} : memref<2x128xf32, #tpu.memory_space<vmem>>, vector<2x128xf32>,
    return
  }
  func.func @transform_0(%arg0: i32) -> (i32, i32, i32) {
    %c0_i32 = arith.constant 0 : i32
    %c0_i32_0 = arith.constant 0 : i32
    %c0_i32_1 = arith.constant 0 : i32
    return %arg0, %c0_i32, %c0_i32_0 : i32, i32, i32
  }
  func.func @transform_1(%arg0: i32) -> (i32, i32) {
    %c0_i32 = arith.constant 0 : i32
    %c0_i32_0 = arith.constant 0 : i32
    %c0_i32_1 = arith.constant 0 : i32
    return %c0_i32, %c0_i32_0 : i32, i32
  }
  func.func @transform_2(%arg0: i32) -> (i32, i32) {
    %c0_i32 = arith.constant 0 : i32
    %c0_i32_0 = arith.constant 0 : i32
    %c0_i32_1 = arith.constant 0 : i32
    return %c0_i32, %c0_i32_0 : i32, i32
  }
  func.func @transform_3(%arg0: i32) -> (i32, i32) {
    %c0_i32 = arith.constant 0 : i32
    %c0_i32_0 = arith.constant 0 : i32
    %c0_i32_1 = arith.constant 0 : i32
    return %c0_i32, %c0_i32_0 : i32, i32
  }
  func.func @transform_4(%arg0: i32) -> (i32, i32) {
    %c0_i32 = arith.constant 0 : i32
    %c0_i32_0 = arith.constant 0 : i32
    %c0_i32_1 = arith.constant 0 : i32
    return %c0_i32, %c0_i32_0 : i32, i32
  }
  func.func @transform_5(%arg0: i32) -> (i32, i32) {
    %c0_i32 = arith.constant 0 : i32
    %c0_i32_0 = arith.constant 0 : i32
    %c0_i32_1 = arith.constant 0 : i32
    return %c0_i32, %c0_i32_0 : i32, i32
  }
  func.func @transform_6(%arg0: i32) -> (i32, i32) {
    %c0_i32 = arith.constant 0 : i32
    %c0_i32_0 = arith.constant 0 : i32
    return %arg0, %c0_i32 : i32, i32
  }
}

</mosaic_0001>

<llo_original>
// kernel: tpu_custom_call.1
$region0: #{tpu_custom_call.1}
  #allocation0 [shape = 'u32[]', space=smem, size = 0x4, offset = 0x4, fixed_abs, tag = 'smem constant byte address 0x4 - core index']
  #allocation1 [shape = 'u32[72,128]{1,0:T(1,128)}', space=vmem, size = 0x9000, scoped, tag = 'internal scratch']
  %s0 = inlined_call_operand.vmem [shape: bf16[2,18,128], index: 0, kind: input, shape index: {}]
  %s1 = inlined_call_operand.hbm [shape: bf16[640,256], index: 1, kind: input, shape index: {}]
  %s2 = inlined_call_operand.vmem [shape: f32[1,256], index: 2, kind: input, shape index: {}]
  %s3 = inlined_call_operand.vmem [shape: f32[14,256], index: 3, kind: input, shape index: {}]
  %s4 = inlined_call_operand.hbm [shape: f32[256,128], index: 4, kind: input, shape index: {}]
  %s5 = inlined_call_operand.vmem [shape: f32[1,128], index: 5, kind: input, shape index: {}]
  %s6 = inlined_call_operand.hbm [shape: f32[2,128], index: 6, kind: output, shape index: {}]
  %s7 = sld [smem:[#allocation0]]
  $region42: #{tpu_custom_call.1} parent=0
    _
  %s9 = ssub.s32 1, %s7
  %s10 = scalar_select 0, %s9, %s7
  $region1: #{tpu_custom_call.1} parent=0
    #allocation2 [shape = 'u8[327680]{0}', space=vmem, size = 0x50000, scoped, tag = 'input window, operand 1, single buffered']
    #allocation3 [shape = 's32[1]{0}', space=sflag, size = 0x4, scoped, tag = 'scoped memory for tpu_custom_call.1']
    #allocation4 [shape = 's32[1]{0}', space=sflag, size = 0x4, scoped, tag = 'scoped memory for tpu_custom_call.1']
    #allocation5 [shape = 'u8[131072]{0}', space=vmem, size = 0x20000, scoped, tag = 'input window, operand 4, single buffered']
    #allocation6 [shape = 's32[1]{0}', space=sflag, size = 0x4, scoped, tag = 'scoped memory for tpu_custom_call.1']
    #allocation7 [shape = 'u8[1024]{0}', space=vmem, size = 0x400, scoped, tag = 'output window, operand 0, single buffered']
    %11 = vsyncpa [#allocation3], 0
    %12 = vsyncpa [#allocation6], 0
    %13 = vsyncpa [#allocation4], 0
    // Predicated region
    $region2: #{tpu_custom_call.1} parent=1 // pred_check
      _
    $region3: #{tpu_custom_call.1} parent=1 // pred_check_branch
      %15 = sbr.rel (0) target = $region5
    $region4: #{tpu_custom_call.1} parent=1 // pred_region
      _
    $region5: #{tpu_custom_call.1} parent=1 // pred_fallthru
      _
    // Predicated region
    $region6: #{tpu_custom_call.1} parent=1 // pred_check
      _
    $region7: #{tpu_custom_call.1} parent=1 // pred_check_branch
      %17 = sbr.rel (0) target = $region9
    $region8: #{tpu_custom_call.1} parent=1 // pred_region
      %19 = vsyncadd [#allocation3], 0
      %s20 = sshll.u32 %s1, 4
      %s21 = int_to_ptr.hbm [resolvable:$true] %s20
      %s22 = sshll.u32 [#allocation2], 4
      %s23 = int_to_ptr.vmem [resolvable:$true] %s22
      %28 = dma.hbm_to_vmem [thread:$0]  %s21, 10240, %s23, [#allocation3], 128, 128, 8
    $region9: #{tpu_custom_call.1} parent=1 // pred_fallthru
      _
    // Predicated region
    $region10: #{tpu_custom_call.1} parent=1 // pred_check
      _
    $region11: #{tpu_custom_call.1} parent=1 // pred_check_branch
      %30 = sbr.rel (0) target = $region13
    $region12: #{tpu_custom_call.1} parent=1 // pred_region
      _
    $region13: #{tpu_custom_call.1} parent=1 // pred_fallthru
      _
    // Predicated region
    $region14: #{tpu_custom_call.1} parent=1 // pred_check
      _
    $region15: #{tpu_custom_call.1} parent=1 // pred_check_branch
      %32 = sbr.rel (0) target = $region17
    $region16: #{tpu_custom_call.1} parent=1 // pred_region
      _
    $region17: #{tpu_custom_call.1} parent=1 // pred_fallthru
      _
    // Predicated region
    $region18: #{tpu_custom_call.1} parent=1 // pred_check
      _
    $region19: #{tpu_custom_call.1} parent=1 // pred_check_branch
      %34 = sbr.rel (0) target = $region21
    $region20: #{tpu_custom_call.1} parent=1 // pred_region
      %36 = vsyncadd [#allocation6], 0
      %s37 = sshll.u32 %s4, 4
      %s38 = int_to_ptr.hbm [resolvable:$true] %s37
      %s39 = sshll.u32 [#allocation5], 4
      %s40 = int_to_ptr.vmem [resolvable:$true] %s39
      %45 = dma.hbm_to_vmem [thread:$0]  %s38, 4096, %s40, [#allocation6], 128, 128, 8
    $region21: #{tpu_custom_call.1} parent=1 // pred_fallthru
      _
    // Predicated region
    $region22: #{tpu_custom_call.1} parent=1 // pred_check
      _
    $region23: #{tpu_custom_call.1} parent=1 // pred_check_branch
      %47 = sbr.rel (0) target = $region25
    $region24: #{tpu_custom_call.1} parent=1 // pred_region
      _
    $region25: #{tpu_custom_call.1} parent=1 // pred_fallthru
      _
    // Predicated region
    $region26: #{tpu_custom_call.1} parent=1 // pred_check
      _
    $region27: #{tpu_custom_call.1} parent=1 // pred_check_branch
      %49 = sbr.rel (0) target = $region29
    $region28: #{tpu_custom_call.1} parent=1 // pred_region
      %51 = dma.done [#allocation3], 10240
    $region29: #{tpu_custom_call.1} parent=1 // pred_fallthru
      _
    // Predicated region
    $region30: #{tpu_custom_call.1} parent=1 // pred_check
      _
    $region31: #{tpu_custom_call.1} parent=1 // pred_check_branch
      %53 = sbr.rel (0) target = $region33
    $region32: #{tpu_custom_call.1} parent=1 // pred_region
      %55 = dma.done [#allocation6], 4096
    $region33: #{tpu_custom_call.1} parent=1 // pred_fallthru
      _
    %v56 = vld [vmem:[%s0] sm:$0xf]
    %v57 = vld [vmem:[%s0 + $0x4] sm:$0xf]
    %v58 = vld [vmem:[%s0 + $0x8] sm:$0x1]
    %v59 = vld [vmem:[%s0 + $0xc] sm:$0xf]
    %v60 = vld [vmem:[%s0 + $0x10] sm:$0xf]
    %v61 = vld [vmem:[%s0 + $0x14] sm:$0x1]
    %v66 = vunpack.c.l.b16 %v56
    %v67 = vunpack.c.l.b16 %v57
    %v68 = vunpack.c.l.b16 %v59
    %v69 = vunpack.c.l.b16 %v60
    %v70 = vpack.c.b16 %v67, %v66
    %v71 = vpack.c.b16 %v69, %v68
    %v73 = vshrl.u32 %v70, 16
    %v75 = vshll.u32 %v70, 16
    %v77 = vrot.slane %v75, 1
    %v78 = vor.u32 %v73, %v77
    %v80 = vshrl.u32 %v71, 16
    %v82 = vshll.u32 %v71, 16
    %v84 = vrot.slane %v82, 1
    %v85 = vor.u32 %v80, %v84
    %v86 = vrot.slane %v70, 1
    %v87 = vrot.slane %v71, 1
    %v90 = vunpack.c.l.b16 %v58
    %v91 = vunpack.c.l.b16 %v61
    %v92 = vpack.c.b16 %v90, %v90
    %v93 = vpack.c.b16 %v91, %v91
    %vm94 = vsmask.f32 6400
    %v95 = vrot.slane %v73, 1
    %v96 = vrot.slane %v75, 2
    %v97 = vor.u32 %v95, %v96
    %v99 = vshll.u32 %v92, 16
    %v101 = vrot.slane %v99, 2
    %v102 = vsel %vm94, %v97, %v101
    %v103 = vrot.slane %v80, 1
    %v104 = vrot.slane %v82, 2
    %v105 = vor.u32 %v103, %v104
    %v107 = vshll.u32 %v93, 16
    %v109 = vrot.slane %v107, 2
    %v110 = vsel %vm94, %v105, %v109
    %vm111 = vcmask 1045504
    %v112 = vrot.slane %v70, 2
    %v113 = vrot.slane %v92, 2
    %v114 = vsel %vm111, %v112, %v113
    %v115 = vrot.slane %v71, 2
    %v116 = vrot.slane %v93, 2
    %v117 = vsel %vm111, %v115, %v116
    %v118 = vld [vmem:[#allocation2] sm:$0xff]
    %v119 = vld [vmem:[#allocation2 + $0x8] sm:$0xff]
    %v120 = vld [vmem:[#allocation2 + $0x10] sm:$0xff]
    %v121 = vld [vmem:[#allocation2 + $0x18] sm:$0xff]
    %v122 = vld [vmem:[#allocation2 + $0x20] sm:$0xff]
    %v123 = vld [vmem:[#allocation2 + $0x28] sm:$0xff]
    %v124 = vld [vmem:[#allocation2 + $0x30] sm:$0xff]
    %v125 = vld [vmem:[#allocation2 + $0x38] sm:$0xff]
    %v126 = vld [vmem:[#allocation2 + $0x40] sm:$0xff]
    %v127 = vld [vmem:[#allocation2 + $0x48] sm:$0xff]
    %v128 = vld [vmem:[#allocation2 + $0x50] sm:$0xff]
    %v129 = vld [vmem:[#allocation2 + $0x58] sm:$0xff]
    %v130 = vld [vmem:[#allocation2 + $0x60] sm:$0xff]
    %v131 = vld [vmem:[#allocation2 + $0x68] sm:$0xff]
    %v132 = vld [vmem:[#allocation2 + $0x70] sm:$0xff]
    %v133 = vld [vmem:[#allocation2 + $0x78] sm:$0xff]
    %v134 = vld [vmem:[#allocation2 + $0x80] sm:$0xff]
    %v135 = vld [vmem:[#allocation2 + $0x88] sm:$0xff]
    %v136 = vld [vmem:[#allocation2 + $0x90] sm:$0xff]
    %v137 = vld [vmem:[#allocation2 + $0x98] sm:$0xff]
    %v138 = vld [vmem:[#allocation2 + $0xa0] sm:$0xff]
    %v139 = vld [vmem:[#allocation2 + $0xa8] sm:$0xff]
    %v140 = vld [vmem:[#allocation2 + $0xb0] sm:$0xff]
    %v141 = vld [vmem:[#allocation2 + $0xb8] sm:$0xff]
    %v142 = vld [vmem:[#allocation2 + $0xc0] sm:$0xff]
    %v143 = vld [vmem:[#allocation2 + $0xc8] sm:$0xff]
    %v144 = vld [vmem:[#allocation2 + $0xd0] sm:$0xff]
    %v145 = vld [vmem:[#allocation2 + $0xd8] sm:$0xff]
    %v146 = vld [vmem:[#allocation2 + $0xe0] sm:$0xff]
    %v147 = vld [vmem:[#allocation2 + $0xe8] sm:$0xff]
    %v148 = vld [vmem:[#allocation2 + $0xf0] sm:$0xff]
    %v149 = vld [vmem:[#allocation2 + $0xf8] sm:$0xff]
    %v150 = vld [vmem:[#allocation2 + $0x100] sm:$0xff]
    %v151 = vld [vmem:[#allocation2 + $0x108] sm:$0xff]
    %v152 = vld [vmem:[#allocation2 + $0x110] sm:$0xff]
    %v153 = vld [vmem:[#allocation2 + $0x118] sm:$0xff]
    %v154 = vld [vmem:[#allocation2 + $0x120] sm:$0xff]
    %v155 = vld [vmem:[#allocation2 + $0x128] sm:$0xff]
    %v156 = vld [vmem:[#allocation2 + $0x130] sm:$0xff]
    %v157 = vld [vmem:[#allocation2 + $0x138] sm:$0xff]
    %v158 = vld [vmem:[#allocation2 + $0x140] sm:$0xff]
    %v159 = vld [vmem:[#allocation2 + $0x148] sm:$0xff]
    %v160 = vld [vmem:[#allocation2 + $0x150] sm:$0xff]
    %v161 = vld [vmem:[#allocation2 + $0x158] sm:$0xff]
    %v162 = vld [vmem:[#allocation2 + $0x160] sm:$0xff]
    %v163 = vld [vmem:[#allocation2 + $0x168] sm:$0xff]
    %v164 = vld [vmem:[#allocation2 + $0x170] sm:$0xff]
    %v165 = vld [vmem:[#allocation2 + $0x178] sm:$0xff]
    %v166 = vld [vmem:[#allocation2 + $0x180] sm:$0xff]
    %v167 = vld [vmem:[#allocation2 + $0x188] sm:$0xff]
    %v168 = vld [vmem:[#allocation2 + $0x190] sm:$0xff]
    %v169 = vld [vmem:[#allocation2 + $0x198] sm:$0xff]
    %v170 = vld [vmem:[#allocation2 + $0x1a0] sm:$0xff]
    %v171 = vld [vmem:[#allocation2 + $0x1a8] sm:$0xff]
    %v172 = vld [vmem:[#allocation2 + $0x1b0] sm:$0xff]
    %v173 = vld [vmem:[#allocation2 + $0x1b8] sm:$0xff]
    %v174 = vld [vmem:[#allocation2 + $0x1c0] sm:$0xff]
    %v175 = vld [vmem:[#allocation2 + $0x1c8] sm:$0xff]
    %v176 = vld [vmem:[#allocation2 + $0x1d0] sm:$0xff]
    %v177 = vld [vmem:[#allocation2 + $0x1d8] sm:$0xff]
    %v178 = vld [vmem:[#allocation2 + $0x1e0] sm:$0xff]
    %v179 = vld [vmem:[#allocation2 + $0x1e8] sm:$0xff]
    %v180 = vld [vmem:[#allocation2 + $0x1f0] sm:$0xff]
    %v181 = vld [vmem:[#allocation2 + $0x1f8] sm:$0xff]
    %v182 = vld [vmem:[#allocation2 + $0x200] sm:$0xff]
    %v183 = vld [vmem:[#allocation2 + $0x208] sm:$0xff]
    %v184 = vld [vmem:[#allocation2 + $0x210] sm:$0xff]
    %v185 = vld [vmem:[#allocation2 + $0x218] sm:$0xff]
    %v186 = vld [vmem:[#allocation2 + $0x220] sm:$0xff]
    %v187 = vld [vmem:[#allocation2 + $0x228] sm:$0xff]
    %v188 = vld [vmem:[#allocation2 + $0x230] sm:$0xff]
    %v189 = vld [vmem:[#allocation2 + $0x238] sm:$0xff]
    %v190 = vld [vmem:[#allocation2 + $0x240] sm:$0xff]
    %v191 = vld [vmem:[#allocation2 + $0x248] sm:$0xff]
    %v192 = vld [vmem:[#allocation2 + $0x250] sm:$0xff]
    %v193 = vld [vmem:[#allocation2 + $0x258] sm:$0xff]
    %v194 = vld [vmem:[#allocation2 + $0x260] sm:$0xff]
    %v195 = vld [vmem:[#allocation2 + $0x268] sm:$0xff]
    %v196 = vld [vmem:[#allocation2 + $0x270] sm:$0xff]
    %v197 = vld [vmem:[#allocation2 + $0x278] sm:$0xff]
    %v198 = vld [vmem:[%s3] sm:$0xff]
    %v199 = vld [vmem:[%s3 + $0x8] sm:$0xff]
    %v200 = vld [vmem:[%s3 + $0x10] sm:$0x3f]
    %v201 = vld [vmem:[%s3 + $0x18] sm:$0x3f]
    %v202 = vrot.slane %v78, 7
    %v203 = vrot.slane %v86, 6
    %v204 = vrot.slane %v102, 5
    %v205 = vrot.slane %v114, 4
    %v206 = vrot.slane %v85, 7
    %v207 = vrot.slane %v87, 6
    %v208 = vrot.slane %v110, 5
    %v209 = vrot.slane %v117, 4
    %vm210 = vcmask 1040384
    %v212 = vsel %vm210, %v70, %v202
    %vm213 = vcmask 1041408
    %v215 = vsel %vm213, %v212, %v203
    %vm216 = vcmask 1043459
    %v219 = vsel %vm216, %v204, %v205
    %vm220 = vcmask 1042432
    %v221 = vsel %vm220, %v215, %v219
    %vm222 = vcmask 1041409
    %v223 = vsel %vm222, %v70, %v202
    %vm224 = vcmask 1042433
    %v225 = vsel %vm224, %v223, %v203
    %vm226 = vcmask 1044484
    %v227 = vsel %vm226, %v204, %v205
    %vm228 = vcmask 1043457
    %v229 = vsel %vm228, %v225, %v227
    %v231 = vrot.slane %v229, 1
    %vm232 = vcmask 1042434
    %v233 = vsel %vm232, %v70, %v202
    %vm234 = vcmask 1043458
    %v235 = vsel %vm234, %v233, %v203
    %vm236 = vcmask 1045509
    %v237 = vsel %vm236, %v204, %v205
    %vm238 = vcmask 1044482
    %v239 = vsel %vm238, %v235, %v237
    %v241 = vrot.slane %v239, 2
    %v242 = vsel %vm216, %v70, %v202
    %vm243 = vcmask 1044483
    %v244 = vsel %vm243, %v242, %v203
    %vm245 = vcmask 1046534
    %v246 = vsel %vm245, %v204, %v205
    %vm247 = vcmask 1045507
    %v248 = vsel %vm247, %v244, %v246
    %v250 = vrot.slane %v248, 3
    %v251 = vsel %vm226, %v70, %v202
    %vm252 = vcmask 1045508
    %v253 = vsel %vm252, %v251, %v203
    %vm254 = vcmask 1046528
    %v255 = vsel %vm254, %v205, %v204
    %vm256 = vcmask 1046532
    %v257 = vsel %vm256, %v253, %v255
    %v259 = vrot.slane %v257, 4
    %v260 = vsel %vm236, %v70, %v202
    %vm261 = vcmask 1046533
    %v262 = vsel %vm261, %v260, %v203
    %v263 = vsel %vm210, %v204, %v205
    %vm264 = vcmask 1044480
    %v265 = vsel %vm264, %v263, %v262
    %v267 = vrot.slane %v265, 5
    %v268 = vsel %vm245, %v70, %v202
    %vm269 = vcmask 1045504
    %v270 = vsel %vm269, %v203, %v268
    %v271 = vsel %vm222, %v204, %v205
    %vm272 = vcmask 1045505
    %v273 = vsel %vm272, %v271, %v270
    %v275 = vrot.slane %v273, 6
    %v277 = vsel %vm210, %v71, %v206
    %v279 = vsel %vm213, %v277, %v207
    %v282 = vsel %vm216, %v208, %v209
    %v283 = vsel %vm220, %v279, %v282
    %v284 = vsel %vm222, %v71, %v206
    %v285 = vsel %vm224, %v284, %v207
    %v286 = vsel %vm226, %v208, %v209
    %v287 = vsel %vm228, %v285, %v286
    %v289 = vrot.slane %v287, 1
    %v290 = vsel %vm232, %v71, %v206
    %v291 = vsel %vm234, %v290, %v207
    %v292 = vsel %vm236, %v208, %v209
    %v293 = vsel %vm238, %v291, %v292
    %v295 = vrot.slane %v293, 2
    %v296 = vsel %vm216, %v71, %v206
    %v297 = vsel %vm243, %v296, %v207
    %v298 = vsel %vm245, %v208, %v209
    %v299 = vsel %vm247, %v297, %v298
    %v301 = vrot.slane %v299, 3
    %v302 = vsel %vm226, %v71, %v206
    %v303 = vsel %vm252, %v302, %v207
    %v304 = vsel %vm254, %v209, %v208
    %v305 = vsel %vm256, %v303, %v304
    %v307 = vrot.slane %v305, 4
    %v308 = vsel %vm236, %v71, %v206
    %v309 = vsel %vm261, %v308, %v207
    %v310 = vsel %vm210, %v208, %v209
    %v311 = vsel %vm264, %v310, %v309
    %v313 = vrot.slane %v311, 5
    %v314 = vsel %vm245, %v71, %v206
    %v315 = vsel %vm269, %v207, %v314
    %v316 = vsel %vm222, %v208, %v209
    %v317 = vsel %vm272, %v316, %v315
    %v319 = vrot.slane %v317, 6
    %v324 = vrot.slane %v199, 6
    %v325 = vrot.slane %v201, 6
    %v326 = vsel %vm213, %v198, %v324
    %v327 = vsel %vm234, %v198, %v324
    %v328 = vrot.slane %v327, 2
    %v329 = vsel %vm252, %v198, %v324
    %v330 = vrot.slane %v329, 4
    %v331 = vsel %vm269, %v324, %v198
    %v332 = vrot.slane %v331, 6
    %v333 = vsel %vm213, %v200, %v325
    %v334 = vsel %vm234, %v200, %v325
    %v335 = vrot.slane %v334, 2
    %v336 = vsel %vm252, %v200, %v325
    %v337 = vrot.slane %v336, 4
    %338 = vst [vmem:[#allocation1] ss:$9 sm:$0xff] %v221
    %s340 = scalar_lea.vmem [#allocation1], 1
    %341 = vst [vmem:[%s340] ss:$9 sm:$0xff] %v231
    %s343 = scalar_lea.vmem [#allocation1], 2
    %344 = vst [vmem:[%s343] ss:$9 sm:$0xff] %v241
    %s346 = scalar_lea.vmem [#allocation1], 3
    %347 = vst [vmem:[%s346] ss:$9 sm:$0xff] %v250
    %s349 = scalar_lea.vmem [#allocation1], 4
    %350 = vst [vmem:[%s349] ss:$9 sm:$0xff] %v259
    %s352 = scalar_lea.vmem [#allocation1], 5
    %353 = vst [vmem:[%s352] ss:$9 sm:$0xff] %v267
    %s355 = scalar_lea.vmem [#allocation1], 6
    %356 = vst [vmem:[%s355] ss:$9 sm:$0xff] %v275
    %s357 = scalar_lea.vmem [#allocation1], 7
    %358 = vst [vmem:[%s357] ss:$9 sm:$0xff] %v283
    %v359 = vld [vmem:[#allocation1] sm:$0xff]
    %v360 = vld [vmem:[#allocation1 + $0x9] sm:$0xff]
    %v361 = vld [vmem:[#allocation1 + $0x12] sm:$0xff]
    %v362 = vld [vmem:[#allocation1 + $0x1b] sm:$0xff]
    %v363 = vld [vmem:[#allocation1 + $0x24] sm:$0xff]
    %365 = vst [vmem:[#allocation1] ss:$9 sm:$0xff] %v289
    %367 = vst [vmem:[%s340] ss:$9 sm:$0xff] %v295
    %369 = vst [vmem:[%s343] ss:$9 sm:$0xff] %v301
    %371 = vst [vmem:[%s346] ss:$9 sm:$0xff] %v307
    %373 = vst [vmem:[%s349] ss:$9 sm:$0xff] %v313
    %375 = vst [vmem:[%s352] ss:$9 sm:$0xff] %v319
    %v376 = vld [vmem:[#allocation1] sm:$0xff]
    %v377 = vld [vmem:[#allocation1 + $0x9] sm:$0xff]
    %v378 = vld [vmem:[#allocation1 + $0x12] sm:$0xff]
    %v379 = vld [vmem:[#allocation1 + $0x1b] sm:$0xff]
    %v380 = vld [vmem:[#allocation1 + $0x24] sm:$0xff]
    %v471 = vunpack.c.l.b16 %v118
    %v472 = vunpack.c.h.b16 %v118
    %v473 = vunpack.c.l.b16 %v119
    %v474 = vunpack.c.h.b16 %v119
    %v475 = vunpack.c.l.b16 %v120
    %v476 = vunpack.c.h.b16 %v120
    %v477 = vunpack.c.l.b16 %v121
    %v478 = vunpack.c.h.b16 %v121
    %v479 = vunpack.c.l.b16 %v122
    %v480 = vunpack.c.h.b16 %v122
    %v481 = vunpack.c.l.b16 %v123
    %v482 = vunpack.c.h.b16 %v123
    %v483 = vunpack.c.l.b16 %v124
    %v484 = vunpack.c.h.b16 %v124
    %v485 = vunpack.c.l.b16 %v125
    %v486 = vunpack.c.h.b16 %v125
    %v487 = vunpack.c.l.b16 %v126
    %v488 = vunpack.c.h.b16 %v126
    %v489 = vunpack.c.l.b16 %v127
    %v490 = vunpack.c.h.b16 %v127
    %v491 = vunpack.c.l.b16 %v128
    %v492 = vunpack.c.h.b16 %v128
    %v493 = vunpack.c.l.b16 %v129
    %v494 = vunpack.c.h.b16 %v129
    %v495 = vunpack.c.l.b16 %v130
    %v496 = vunpack.c.h.b16 %v130
    %v497 = vunpack.c.l.b16 %v131
    %v498 = vunpack.c.h.b16 %v131
    %v499 = vunpack.c.l.b16 %v132
    %v500 = vunpack.c.h.b16 %v132
    %v501 = vunpack.c.l.b16 %v133
    %v502 = vunpack.c.h.b16 %v133
    %v503 = vunpack.c.l.b16 %v134
    %v504 = vunpack.c.h.b16 %v134
    %v505 = vunpack.c.l.b16 %v135
    %v506 = vunpack.c.h.b16 %v135
    %v507 = vunpack.c.l.b16 %v136
    %v508 = vunpack.c.h.b16 %v136
    %v509 = vunpack.c.l.b16 %v137
    %v510 = vunpack.c.h.b16 %v137
    %v511 = vunpack.c.l.b16 %v138
    %v512 = vunpack.c.h.b16 %v138
    %v513 = vunpack.c.l.b16 %v139
    %v514 = vunpack.c.h.b16 %v139
    %v515 = vunpack.c.l.b16 %v140
    %v516 = vunpack.c.h.b16 %v140
    %v517 = vunpack.c.l.b16 %v141
    %v518 = vunpack.c.h.b16 %v141
    %v519 = vunpack.c.l.b16 %v142
    %v520 = vunpack.c.h.b16 %v142
    %v521 = vunpack.c.l.b16 %v143
    %v522 = vunpack.c.h.b16 %v143
    %v523 = vunpack.c.l.b16 %v144
    %v524 = vunpack.c.h.b16 %v144
    %v525 = vunpack.c.l.b16 %v145
    %v526 = vunpack.c.h.b16 %v145
    %v527 = vunpack.c.l.b16 %v146
    %v528 = vunpack.c.h.b16 %v146
    %v529 = vunpack.c.l.b16 %v147
    %v530 = vunpack.c.h.b16 %v147
    %v531 = vunpack.c.l.b16 %v148
    %v532 = vunpack.c.h.b16 %v148
    %v533 = vunpack.c.l.b16 %v149
    %v534 = vunpack.c.h.b16 %v149
    %v535 = vunpack.c.l.b16 %v150
    %v536 = vunpack.c.h.b16 %v150
    %v537 = vunpack.c.l.b16 %v151
    %v538 = vunpack.c.h.b16 %v151
    %v539 = vunpack.c.l.b16 %v152
    %v540 = vunpack.c.h.b16 %v152
    %v541 = vunpack.c.l.b16 %v153
    %v542 = vunpack.c.h.b16 %v153
    %v543 = vunpack.c.l.b16 %v154
    %v544 = vunpack.c.h.b16 %v154
    %v545 = vunpack.c.l.b16 %v155
    %v546 = vunpack.c.h.b16 %v155
    %v547 = vunpack.c.l.b16 %v156
    %v548 = vunpack.c.h.b16 %v156
    %v549 = vunpack.c.l.b16 %v157
    %v550 = vunpack.c.h.b16 %v157
    %v551 = vunpack.c.l.b16 %v158
    %v552 = vunpack.c.h.b16 %v158
    %v553 = vunpack.c.l.b16 %v159
    %v554 = vunpack.c.h.b16 %v159
    %v555 = vunpack.c.l.b16 %v160
    %v556 = vunpack.c.h.b16 %v160
    %v557 = vunpack.c.l.b16 %v161
    %v558 = vunpack.c.h.b16 %v161
    %v559 = vunpack.c.l.b16 %v162
    %v560 = vunpack.c.h.b16 %v162
    %v561 = vunpack.c.l.b16 %v163
    %v562 = vunpack.c.h.b16 %v163
    %v563 = vunpack.c.l.b16 %v164
    %v564 = vunpack.c.h.b16 %v164
    %v565 = vunpack.c.l.b16 %v165
    %v566 = vunpack.c.h.b16 %v165
    %v567 = vunpack.c.l.b16 %v166
    %v568 = vunpack.c.h.b16 %v166
    %v569 = vunpack.c.l.b16 %v167
    %v570 = vunpack.c.h.b16 %v167
    %v571 = vunpack.c.l.b16 %v168
    %v572 = vunpack.c.h.b16 %v168
    %v573 = vunpack.c.l.b16 %v169
    %v574 = vunpack.c.h.b16 %v169
    %v575 = vunpack.c.l.b16 %v170
    %v576 = vunpack.c.h.b16 %v170
    %v577 = vunpack.c.l.b16 %v171
    %v578 = vunpack.c.h.b16 %v171
    %v579 = vunpack.c.l.b16 %v172
    %v580 = vunpack.c.h.b16 %v172
    %v581 = vunpack.c.l.b16 %v173
    %v582 = vunpack.c.h.b16 %v173
    %v583 = vunpack.c.l.b16 %v174
    %v584 = vunpack.c.h.b16 %v174
    %v585 = vunpack.c.l.b16 %v175
    %v586 = vunpack.c.h.b16 %v175
    %v587 = vunpack.c.l.b16 %v176
    %v588 = vunpack.c.h.b16 %v176
    %v589 = vunpack.c.l.b16 %v177
    %v590 = vunpack.c.h.b16 %v177
    %v591 = vunpack.c.l.b16 %v178
    %v592 = vunpack.c.h.b16 %v178
    %v593 = vunpack.c.l.b16 %v179
    %v594 = vunpack.c.h.b16 %v179
    %v595 = vunpack.c.l.b16 %v180
    %v596 = vunpack.c.h.b16 %v180
    %v597 = vunpack.c.l.b16 %v181
    %v598 = vunpack.c.h.b16 %v181
    %v599 = vunpack.c.l.b16 %v182
    %v600 = vunpack.c.h.b16 %v182
    %v601 = vunpack.c.l.b16 %v183
    %v602 = vunpack.c.h.b16 %v183
    %v603 = vunpack.c.l.b16 %v184
    %v604 = vunpack.c.h.b16 %v184
    %v605 = vunpack.c.l.b16 %v185
    %v606 = vunpack.c.h.b16 %v185
    %v607 = vunpack.c.l.b16 %v186
    %v608 = vunpack.c.h.b16 %v186
    %v609 = vunpack.c.l.b16 %v187
    %v610 = vunpack.c.h.b16 %v187
    %v611 = vunpack.c.l.b16 %v188
    %v612 = vunpack.c.h.b16 %v188
    %v613 = vunpack.c.l.b16 %v189
    %v614 = vunpack.c.h.b16 %v189
    %v615 = vunpack.c.l.b16 %v190
    %v616 = vunpack.c.h.b16 %v190
    %v617 = vunpack.c.l.b16 %v191
    %v618 = vunpack.c.h.b16 %v191
    %v619 = vunpack.c.l.b16 %v192
    %v620 = vunpack.c.h.b16 %v192
    %v621 = vunpack.c.l.b16 %v193
    %v622 = vunpack.c.h.b16 %v193
    %v623 = vunpack.c.l.b16 %v194
    %v624 = vunpack.c.h.b16 %v194
    %v625 = vunpack.c.l.b16 %v195
    %v626 = vunpack.c.h.b16 %v195
    %v627 = vunpack.c.l.b16 %v196
    %v628 = vunpack.c.h.b16 %v196
    %v629 = vunpack.c.l.b16 %v197
    %v630 = vunpack.c.h.b16 %v197
    %v631 = vpack.c.b16 %v473, %v471
    %v632 = vpack.c.b16 %v474, %v472
    %v633 = vpack.c.b16 %v477, %v475
    %v634 = vpack.c.b16 %v478, %v476
    %v635 = vpack.c.b16 %v481, %v479
    %v636 = vpack.c.b16 %v482, %v480
    %v637 = vpack.c.b16 %v485, %v483
    %v638 = vpack.c.b16 %v486, %v484
    %v639 = vpack.c.b16 %v489, %v487
    %v640 = vpack.c.b16 %v490, %v488
    %v641 = vpack.c.b16 %v493, %v491
    %v642 = vpack.c.b16 %v494, %v492
    %v643 = vpack.c.b16 %v497, %v495
    %v644 = vpack.c.b16 %v498, %v496
    %v645 = vpack.c.b16 %v501, %v499
    %v646 = vpack.c.b16 %v502, %v500
    %v647 = vpack.c.b16 %v505, %v503
    %v648 = vpack.c.b16 %v506, %v504
    %v649 = vpack.c.b16 %v509, %v507
    %v650 = vpack.c.b16 %v510, %v508
    %v651 = vpack.c.b16 %v513, %v511
    %v652 = vpack.c.b16 %v514, %v512
    %v653 = vpack.c.b16 %v517, %v515
    %v654 = vpack.c.b16 %v518, %v516
    %v655 = vpack.c.b16 %v521, %v519
    %v656 = vpack.c.b16 %v522, %v520
    %v657 = vpack.c.b16 %v525, %v523
    %v658 = vpack.c.b16 %v526, %v524
    %v659 = vpack.c.b16 %v529, %v527
    %v660 = vpack.c.b16 %v530, %v528
    %v661 = vpack.c.b16 %v533, %v531
    %v662 = vpack.c.b16 %v534, %v532
    %v663 = vpack.c.b16 %v537, %v535
    %v664 = vpack.c.b16 %v538, %v536
    %v665 = vpack.c.b16 %v541, %v539
    %v666 = vpack.c.b16 %v542, %v540
    %v667 = vpack.c.b16 %v545, %v543
    %v668 = vpack.c.b16 %v546, %v544
    %v669 = vpack.c.b16 %v549, %v547
    %v670 = vpack.c.b16 %v550, %v548
    %v671 = vpack.c.b16 %v553, %v551
    %v672 = vpack.c.b16 %v554, %v552
    %v673 = vpack.c.b16 %v557, %v555
    %v674 = vpack.c.b16 %v558, %v556
    %v675 = vpack.c.b16 %v561, %v559
    %v676 = vpack.c.b16 %v562, %v560
    %v677 = vpack.c.b16 %v565, %v563
    %v678 = vpack.c.b16 %v566, %v564
    %v679 = vpack.c.b16 %v569, %v567
    %v680 = vpack.c.b16 %v570, %v568
    %v681 = vpack.c.b16 %v573, %v571
    %v682 = vpack.c.b16 %v574, %v572
    %v683 = vpack.c.b16 %v577, %v575
    %v684 = vpack.c.b16 %v578, %v576
    %v685 = vpack.c.b16 %v581, %v579
    %v686 = vpack.c.b16 %v582, %v580
    %v687 = vpack.c.b16 %v585, %v583
    %v688 = vpack.c.b16 %v586, %v584
    %v689 = vpack.c.b16 %v589, %v587
    %v690 = vpack.c.b16 %v590, %v588
    %v691 = vpack.c.b16 %v593, %v591
    %v692 = vpack.c.b16 %v594, %v592
    %v693 = vpack.c.b16 %v597, %v595
    %v694 = vpack.c.b16 %v598, %v596
    %v695 = vpack.c.b16 %v601, %v599
    %v696 = vpack.c.b16 %v602, %v600
    %v697 = vpack.c.b16 %v605, %v603
    %v698 = vpack.c.b16 %v606, %v604
    %v699 = vpack.c.b16 %v609, %v607
    %v700 = vpack.c.b16 %v610, %v608
    %v701 = vpack.c.b16 %v613, %v611
    %v702 = vpack.c.b16 %v614, %v612
    %v703 = vpack.c.b16 %v617, %v615
    %v704 = vpack.c.b16 %v618, %v616
    %v705 = vpack.c.b16 %v621, %v619
    %v706 = vpack.c.b16 %v622, %v620
    %v707 = vpack.c.b16 %v625, %v623
    %v708 = vpack.c.b16 %v626, %v624
    %v709 = vpack.c.b16 %v629, %v627
    %v710 = vpack.c.b16 %v630, %v628
    %791 = vst [vmem:[#allocation1] ss:$4 sm:$0xff] %v326
    %s792 = scalar_lea.vmem [#allocation1], 1
    %793 = vst [vmem:[%s792] ss:$4 sm:$0xff] %v328
    %s794 = scalar_lea.vmem [#allocation1], 2
    %795 = vst [vmem:[%s794] ss:$4 sm:$0xff] %v330
    %s796 = scalar_lea.vmem [#allocation1], 3
    %797 = vst [vmem:[%s796] ss:$4 sm:$0xff] %v332
    %s798 = scalar_lea.vmem [#allocation1], 32
    %799 = vst [vmem:[%s798] ss:$4 sm:$0xff] %v333
    %s800 = scalar_lea.vmem [#allocation1], 33
    %801 = vst [vmem:[%s800] ss:$4 sm:$0xff] %v335
    %s802 = scalar_lea.vmem [#allocation1], 34
    %803 = vst [vmem:[%s802] ss:$4 sm:$0xff] %v337
    %s804 = scalar_lea.vmem [#allocation1], 35
    %805 = vst [vmem:[%s804] ss:$4 sm:$0xff] %v326
    %v806 = vld.sshfl [vmem:[#allocation1] sm:$0xff pattern:$0x73625140]
    %v807 = vld.sshfl [vmem:[#allocation1 + $0x8] sm:$0xff pattern:$0x73625140]
    %v808 = vld.sshfl [vmem:[#allocation1 + $0x20] sm:$0xff pattern:$0x73625140]
    %v809 = vld.sshfl [vmem:[#allocation1 + $0x28] sm:$0xff pattern:$0x73625140]
    %810 = vst [vmem:[#allocation1] ss:$4 sm:$0xff] %v328
    %811 = vst [vmem:[%s792] ss:$4 sm:$0xff] %v330
    %812 = vst [vmem:[%s794] ss:$4 sm:$0xff] %v332
    %813 = vst [vmem:[%s796] ss:$4 sm:$0xff] %v333
    %814 = vst [vmem:[%s798] ss:$4 sm:$0xff] %v335
    %815 = vst [vmem:[%s800] ss:$4 sm:$0xff] %v337
    %v816 = vld.sshfl [vmem:[#allocation1] sm:$0xff pattern:$0x73625140]
    %v817 = vld.sshfl [vmem:[#allocation1 + $0x8] sm:$0xff pattern:$0x73625140]
    %v818 = vld.sshfl [vmem:[#allocation1 + $0x20] sm:$0xff pattern:$0x73625140]
    %v819 = vld.sshfl [vmem:[#allocation1 + $0x28] sm:$0xff pattern:$0x73625140]
    %828 = vmatpush.bf16.msra.mxu0 %v645
    %829 = vmatpush.bf16.msra.mxu0 %v643
    %830 = vmatpush.bf16.msra.mxu0 %v641
    %831 = vmatpush.bf16.msra.mxu0 %v639
    %832 = vmatpush.bf16.msra.mxu0 %v637
    %833 = vmatpush.bf16.msra.mxu0 %v635
    %834 = vmatpush.bf16.msra.mxu0 %v633
    %835 = vmatpush.bf16.msra.mxu0 %v631
    %836 = vmatmul.bf16.gmra.mxu0 %v359
    %v837 = vpop.f32.mrf.mxu0
    %v838 = vadd.f32 %v806, %v837
    %v839 = vpop.f32.mrf.mxu0
    %v840 = vadd.f32 %v808, %v839
    %841 = vmatmul.bf16.gmra.mxu0 %v376
    %v842 = vpop.f32.mrf.mxu0
    %v843 = vadd.f32 %v816, %v842
    %v844 = vpop.f32.mrf.mxu0
    %v845 = vadd.f32 %v818, %v844
    %846 = vdwg.mxu0
    %847 = vmatpush.bf16.msra.mxu0 %v661
    %848 = vmatpush.bf16.msra.mxu0 %v659
    %849 = vmatpush.bf16.msra.mxu0 %v657
    %850 = vmatpush.bf16.msra.mxu0 %v655
    %851 = vmatpush.bf16.msra.mxu0 %v653
    %852 = vmatpush.bf16.msra.mxu0 %v651
    %853 = vmatpush.bf16.msra.mxu0 %v649
    %854 = vmatpush.bf16.msra.mxu0 %v647
    %855 = vmatmul.bf16.gmra.mxu0 %v360
    %v856 = vpop.f32.mrf.mxu0
    %v857 = vadd.f32 %v838, %v856
    %v858 = vpop.f32.mrf.mxu0
    %v859 = vadd.f32 %v840, %v858
    %860 = vmatmul.bf16.gmra.mxu0 %v377
    %v861 = vpop.f32.mrf.mxu0
    %v862 = vadd.f32 %v843, %v861
    %v863 = vpop.f32.mrf.mxu0
    %v864 = vadd.f32 %v845, %v863
    %865 = vdwg.mxu0
    %866 = vmatpush.bf16.msra.mxu0 %v677
    %867 = vmatpush.bf16.msra.mxu0 %v675
    %868 = vmatpush.bf16.msra.mxu0 %v673
    %869 = vmatpush.bf16.msra.mxu0 %v671
    %870 = vmatpush.bf16.msra.mxu0 %v669
    %871 = vmatpush.bf16.msra.mxu0 %v667
    %872 = vmatpush.bf16.msra.mxu0 %v665
    %873 = vmatpush.bf16.msra.mxu0 %v663
    %874 = vmatmul.bf16.gmra.mxu0 %v361
    %v875 = vpop.f32.mrf.mxu0
    %v876 = vadd.f32 %v857, %v875
    %v877 = vpop.f32.mrf.mxu0
    %v878 = vadd.f32 %v859, %v877
    %879 = vmatmul.bf16.gmra.mxu0 %v378
    %v880 = vpop.f32.mrf.mxu0
    %v881 = vadd.f32 %v862, %v880
    %v882 = vpop.f32.mrf.mxu0
    %v883 = vadd.f32 %v864, %v882
    %884 = vdwg.mxu0
    %885 = vmatpush.bf16.msra.mxu0 %v693
    %886 = vmatpush.bf16.msra.mxu0 %v691
    %887 = vmatpush.bf16.msra.mxu0 %v689
    %888 = vmatpush.bf16.msra.mxu0 %v687
    %889 = vmatpush.bf16.msra.mxu0 %v685
    %890 = vmatpush.bf16.msra.mxu0 %v683
    %891 = vmatpush.bf16.msra.mxu0 %v681
    %892 = vmatpush.bf16.msra.mxu0 %v679
    %893 = vmatmul.bf16.gmra.mxu0 %v362
    %v894 = vpop.f32.mrf.mxu0
    %v895 = vadd.f32 %v876, %v894
    %v896 = vpop.f32.mrf.mxu0
    %v897 = vadd.f32 %v878, %v896
    %898 = vmatmul.bf16.gmra.mxu0 %v379
    %v899 = vpop.f32.mrf.mxu0
    %v900 = vadd.f32 %v881, %v899
    %v901 = vpop.f32.mrf.mxu0
    %v902 = vadd.f32 %v883, %v901
    %903 = vdwg.mxu0
    %904 = vmatpush.bf16.msra.mxu0 %v709
    %905 = vmatpush.bf16.msra.mxu0 %v707
    %906 = vmatpush.bf16.msra.mxu0 %v705
    %907 = vmatpush.bf16.msra.mxu0 %v703
    %908 = vmatpush.bf16.msra.mxu0 %v701
    %909 = vmatpush.bf16.msra.mxu0 %v699
    %910 = vmatpush.bf16.msra.mxu0 %v697
    %911 = vmatpush.bf16.msra.mxu0 %v695
    %912 = vmatmul.bf16.gmra.mxu0 %v363
    %v913 = vpop.f32.mrf.mxu0
    %v914 = vadd.f32 %v895, %v913
    %v915 = vpop.f32.mrf.mxu0
    %v916 = vadd.f32 %v897, %v915
    %917 = vmatmul.bf16.gmra.mxu0 %v380
    %v918 = vpop.f32.mrf.mxu0
    %v919 = vadd.f32 %v900, %v918
    %v920 = vpop.f32.mrf.mxu0
    %v921 = vadd.f32 %v902, %v920
    %922 = vdwg.mxu0
    %923 = vmatpush.bf16.msra.mxu0 %v646
    %924 = vmatpush.bf16.msra.mxu0 %v644
    %925 = vmatpush.bf16.msra.mxu0 %v642
    %926 = vmatpush.bf16.msra.mxu0 %v640
    %927 = vmatpush.bf16.msra.mxu0 %v638
    %928 = vmatpush.bf16.msra.mxu0 %v636
    %929 = vmatpush.bf16.msra.mxu0 %v634
    %930 = vmatpush.bf16.msra.mxu0 %v632
    %931 = vmatmul.bf16.gmra.mxu0 %v359
    %v932 = vpop.f32.mrf.mxu0
    %v933 = vadd.f32 %v807, %v932
    %v934 = vpop.f32.mrf.mxu0
    %v935 = vadd.f32 %v809, %v934
    %936 = vmatmul.bf16.gmra.mxu0 %v376
    %v937 = vpop.f32.mrf.mxu0
    %v938 = vadd.f32 %v817, %v937
    %v939 = vpop.f32.mrf.mxu0
    %v940 = vadd.f32 %v819, %v939
    %941 = vdwg.mxu0
    %942 = vmatpush.bf16.msra.mxu0 %v662
    %943 = vmatpush.bf16.msra.mxu0 %v660
    %944 = vmatpush.bf16.msra.mxu0 %v658
    %945 = vmatpush.bf16.msra.mxu0 %v656
    %946 = vmatpush.bf16.msra.mxu0 %v654
    %947 = vmatpush.bf16.msra.mxu0 %v652
    %948 = vmatpush.bf16.msra.mxu0 %v650
    %949 = vmatpush.bf16.msra.mxu0 %v648
    %950 = vmatmul.bf16.gmra.mxu0 %v360
    %v951 = vpop.f32.mrf.mxu0
    %v952 = vadd.f32 %v933, %v951
    %v953 = vpop.f32.mrf.mxu0
    %v954 = vadd.f32 %v935, %v953
    %955 = vmatmul.bf16.gmra.mxu0 %v377
    %v956 = vpop.f32.mrf.mxu0
    %v957 = vadd.f32 %v938, %v956
    %v958 = vpop.f32.mrf.mxu0
    %v959 = vadd.f32 %v940, %v958
    %960 = vdwg.mxu0
    %961 = vmatpush.bf16.msra.mxu0 %v678
    %962 = vmatpush.bf16.msra.mxu0 %v676
    %963 = vmatpush.bf16.msra.mxu0 %v674
    %964 = vmatpush.bf16.msra.mxu0 %v672
    %965 = vmatpush.bf16.msra.mxu0 %v670
    %966 = vmatpush.bf16.msra.mxu0 %v668
    %967 = vmatpush.bf16.msra.mxu0 %v666
    %968 = vmatpush.bf16.msra.mxu0 %v664
    %969 = vmatmul.bf16.gmra.mxu0 %v361
    %v970 = vpop.f32.mrf.mxu0
    %v971 = vadd.f32 %v952, %v970
    %v972 = vpop.f32.mrf.mxu0
    %v973 = vadd.f32 %v954, %v972
    %974 = vmatmul.bf16.gmra.mxu0 %v378
    %v975 = vpop.f32.mrf.mxu0
    %v976 = vadd.f32 %v957, %v975
    %v977 = vpop.f32.mrf.mxu0
    %v978 = vadd.f32 %v959, %v977
    %979 = vdwg.mxu0
    %980 = vmatpush.bf16.msra.mxu0 %v694
    %981 = vmatpush.bf16.msra.mxu0 %v692
    %982 = vmatpush.bf16.msra.mxu0 %v690
    %983 = vmatpush.bf16.msra.mxu0 %v688
    %984 = vmatpush.bf16.msra.mxu0 %v686
    %985 = vmatpush.bf16.msra.mxu0 %v684
    %986 = vmatpush.bf16.msra.mxu0 %v682
    %987 = vmatpush.bf16.msra.mxu0 %v680
    %988 = vmatmul.bf16.gmra.mxu0 %v362
    %v989 = vpop.f32.mrf.mxu0
    %v990 = vadd.f32 %v971, %v989
    %v991 = vpop.f32.mrf.mxu0
    %v992 = vadd.f32 %v973, %v991
    %993 = vmatmul.bf16.gmra.mxu0 %v379
    %v994 = vpop.f32.mrf.mxu0
    %v995 = vadd.f32 %v976, %v994
    %v996 = vpop.f32.mrf.mxu0
    %v997 = vadd.f32 %v978, %v996
    %998 = vdwg.mxu0
    %999 = vmatpush.bf16.msra.mxu0 %v710
    %1000 = vmatpush.bf16.msra.mxu0 %v708
    %1001 = vmatpush.bf16.msra.mxu0 %v706
    %1002 = vmatpush.bf16.msra.mxu0 %v704
    %1003 = vmatpush.bf16.msra.mxu0 %v702
    %1004 = vmatpush.bf16.msra.mxu0 %v700
    %1005 = vmatpush.bf16.msra.mxu0 %v698
    %1006 = vmatpush.bf16.msra.mxu0 %v696
    %1007 = vmatmul.bf16.gmra.mxu0 %v363
    %v1008 = vpop.f32.mrf.mxu0
    %v1009 = vadd.f32 %v990, %v1008
    %v1010 = vpop.f32.mrf.mxu0
    %v1011 = vadd.f32 %v992, %v1010
    %1012 = vmatmul.bf16.gmra.mxu0 %v380
    %v1013 = vpop.f32.mrf.mxu0
    %v1014 = vadd.f32 %v995, %v1013
    %v1015 = vpop.f32.mrf.mxu0
    %v1016 = vadd.f32 %v997, %v1015
    %1017 = vdwg.mxu0
    %v1026 = vrot.slane %v1009, 6
    %v1027 = vrot.slane %v1011, 6
    %v1028 = vrot.slane %v1014, 6
    %v1029 = vrot.slane %v1016, 6
    %v1030 = vsel %vm213, %v914, %v1026
    %v1031 = vsel %vm234, %v914, %v1026
    %v1032 = vrot.slane %v1031, 2
    %v1033 = vsel %vm252, %v914, %v1026
    %v1034 = vrot.slane %v1033, 4
    %v1035 = vsel %vm269, %v1026, %v914
    %v1036 = vrot.slane %v1035, 6
    %v1037 = vsel %vm213, %v916, %v1027
    %v1038 = vsel %vm234, %v916, %v1027
    %v1039 = vrot.slane %v1038, 2
    %v1040 = vsel %vm252, %v916, %v1027
    %v1041 = vrot.slane %v1040, 4
    %v1042 = vsel %vm269, %v1027, %v916
    %v1043 = vrot.slane %v1042, 6
    %v1044 = vsel %vm213, %v919, %v1028
    %v1045 = vsel %vm234, %v919, %v1028
    %v1046 = vrot.slane %v1045, 2
    %v1047 = vsel %vm252, %v919, %v1028
    %v1048 = vrot.slane %v1047, 4
    %v1049 = vsel %vm269, %v1028, %v919
    %v1050 = vrot.slane %v1049, 6
    %v1051 = vsel %vm213, %v921, %v1029
    %v1052 = vsel %vm234, %v921, %v1029
    %v1053 = vrot.slane %v1052, 2
    %1054 = vst [vmem:[#allocation1] ss:$4 sm:$0xff] %v1030
    %s1055 = scalar_lea.vmem [#allocation1], 1
    %1056 = vst [vmem:[%s1055] ss:$4 sm:$0xff] %v1032
    %s1057 = scalar_lea.vmem [#allocation1], 2
    %1058 = vst [vmem:[%s1057] ss:$4 sm:$0xff] %v1034
    %s1059 = scalar_lea.vmem [#allocation1], 3
    %1060 = vst [vmem:[%s1059] ss:$4 sm:$0xff] %v1036
    %s1061 = scalar_lea.vmem [#allocation1], 32
    %1062 = vst [vmem:[%s1061] ss:$4 sm:$0xff] %v1037
    %s1063 = scalar_lea.vmem [#allocation1], 33
    %1064 = vst [vmem:[%s1063] ss:$4 sm:$0xff] %v1039
    %s1065 = scalar_lea.vmem [#allocation1], 34
    %1066 = vst [vmem:[%s1065] ss:$4 sm:$0xff] %v1041
    %v1067 = vld.sshfl [vmem:[#allocation1] sm:$0xff pattern:$0x73625140]
    %v1068 = vld.sshfl [vmem:[#allocation1 + $0x8] sm:$0xff pattern:$0x73625140]
    %v1069 = vld.sshfl [vmem:[#allocation1 + $0x20] sm:$0xff pattern:$0x73625140]
    %v1070 = vld.sshfl [vmem:[#allocation1 + $0x28] sm:$0xff pattern:$0x73625140]
    %1071 = vst [vmem:[#allocation1] ss:$4 sm:$0xff] %v1043
    %1072 = vst [vmem:[%s1055] ss:$4 sm:$0xff] %v1044
    %1073 = vst [vmem:[%s1057] ss:$4 sm:$0xff] %v1046
    %1074 = vst [vmem:[%s1059] ss:$4 sm:$0xff] %v1048
    %1075 = vst [vmem:[%s1061] ss:$4 sm:$0xff] %v1050
    %1076 = vst [vmem:[%s1063] ss:$4 sm:$0xff] %v1051
    %1077 = vst [vmem:[%s1065] ss:$4 sm:$0xff] %v1053
    %v1078 = vld.sshfl [vmem:[#allocation1] sm:$0xff pattern:$0x73625140]
    %v1079 = vld.sshfl [vmem:[#allocation1 + $0x8] sm:$0xff pattern:$0x73625140]
    %v1080 = vld.sshfl [vmem:[#allocation1 + $0x20] sm:$0xff pattern:$0x73625140]
    %v1081 = vld.sshfl [vmem:[#allocation1 + $0x28] sm:$0xff pattern:$0x73625140]
    %v1090 = vsel %vm269, %v1069, -inf
    %v1091 = vmax.f32 %v1067, %v1090
    %v1092 = vrot.slane %v1091, 4
    %v1093 = vmax.f32 %v1091, %v1092
    %v1094 = vrot.slane %v1093, 2
    %v1095 = vmax.f32 %v1093, %v1094
    %v1096 = vrot.slane %v1095, 1
    %v1097 = vmax.f32 %v1095, %v1096
    %v1098 = vsel %vm269, %v1070, -inf
    %v1099 = vmax.f32 %v1068, %v1098
    %v1100 = vrot.slane %v1099, 4
    %v1101 = vmax.f32 %v1099, %v1100
    %v1102 = vrot.slane %v1101, 2
    %v1103 = vmax.f32 %v1101, %v1102
    %v1104 = vrot.slane %v1103, 1
    %v1105 = vmax.f32 %v1103, %v1104
    %v1106 = vsel %vm269, %v1080, -inf
    %v1107 = vmax.f32 %v1078, %v1106
    %v1108 = vrot.slane %v1107, 4
    %v1109 = vmax.f32 %v1107, %v1108
    %v1110 = vrot.slane %v1109, 2
    %v1111 = vmax.f32 %v1109, %v1110
    %v1112 = vrot.slane %v1111, 1
    %v1113 = vmax.f32 %v1111, %v1112
    %v1114 = vsel %vm269, %v1081, -inf
    %v1115 = vmax.f32 %v1079, %v1114
    %v1116 = vrot.slane %v1115, 4
    %v1117 = vmax.f32 %v1115, %v1116
    %v1118 = vrot.slane %v1117, 2
    %v1119 = vmax.f32 %v1117, %v1118
    %v1120 = vrot.slane %v1119, 1
    %v1121 = vmax.f32 %v1119, %v1120
    %v1122 = vld [vmem:[%s2] sm:$0x3]
    %v1124 = vperm.slane %v1122, 0
    %v1125 = vperm.slane %v1122, 1
    %v1128 = vadd.f32 %v1097, %v1124
    %v1129 = vadd.f32 %v1105, %v1125
    %v1130 = vadd.f32 %v1113, %v1124
    %v1131 = vadd.f32 %v1121, %v1125
    %v1132 = vmax.f32 %v1128, 0.0
    %v1133 = vmax.f32 %v1129, 0.0
    %v1134 = vmax.f32 %v1130, 0.0
    %v1135 = vmax.f32 %v1131, 0.0
    %v1136 = vld [vmem:[#allocation5] sm:$0xff]
    %v1137 = vld [vmem:[#allocation5 + $0x8] sm:$0xff]
    %v1138 = vld [vmem:[#allocation5 + $0x10] sm:$0xff]
    %v1139 = vld [vmem:[#allocation5 + $0x18] sm:$0xff]
    %v1140 = vld [vmem:[#allocation5 + $0x20] sm:$0xff]
    %v1141 = vld [vmem:[#allocation5 + $0x28] sm:$0xff]
    %v1142 = vld [vmem:[#allocation5 + $0x30] sm:$0xff]
    %v1143 = vld [vmem:[#allocation5 + $0x38] sm:$0xff]
    %v1144 = vld [vmem:[#allocation5 + $0x40] sm:$0xff]
    %v1145 = vld [vmem:[#allocation5 + $0x48] sm:$0xff]
    %v1146 = vld [vmem:[#allocation5 + $0x50] sm:$0xff]
    %v1147 = vld [vmem:[#allocation5 + $0x58] sm:$0xff]
    %v1148 = vld [vmem:[#allocation5 + $0x60] sm:$0xff]
    %v1149 = vld [vmem:[#allocation5 + $0x68] sm:$0xff]
    %v1150 = vld [vmem:[#allocation5 + $0x70] sm:$0xff]
    %v1151 = vld [vmem:[#allocation5 + $0x78] sm:$0xff]
    %v1152 = vld [vmem:[#allocation5 + $0x80] sm:$0xff]
    %v1153 = vld [vmem:[#allocation5 + $0x88] sm:$0xff]
    %v1154 = vld [vmem:[#allocation5 + $0x90] sm:$0xff]
    %v1155 = vld [vmem:[#allocation5 + $0x98] sm:$0xff]
    %v1156 = vld [vmem:[#allocation5 + $0xa0] sm:$0xff]
    %v1157 = vld [vmem:[#allocation5 + $0xa8] sm:$0xff]
    %v1158 = vld [vmem:[#allocation5 + $0xb0] sm:$0xff]
    %v1159 = vld [vmem:[#allocation5 + $0xb8] sm:$0xff]
    %v1160 = vld [vmem:[#allocation5 + $0xc0] sm:$0xff]
    %v1161 = vld [vmem:[#allocation5 + $0xc8] sm:$0xff]
    %v1162 = vld [vmem:[#allocation5 + $0xd0] sm:$0xff]
    %v1163 = vld [vmem:[#allocation5 + $0xd8] sm:$0xff]
    %v1164 = vld [vmem:[#allocation5 + $0xe0] sm:$0xff]
    %v1165 = vld [vmem:[#allocation5 + $0xe8] sm:$0xff]
    %v1166 = vld [vmem:[#allocation5 + $0xf0] sm:$0xff]
    %v1167 = vld [vmem:[#allocation5 + $0xf8] sm:$0xff]
    %v1168 = vld [vmem:[%s5] sm:$0x1]
    %v1170 = vperm.slane %v1168, 0
    %v1176 = vrot.slane %v1134, 7
    %v1177 = vsel %vm222, %v1176, %v1132
    %v1178 = vrot.slane %v1135, 7
    %v1179 = vsel %vm222, %v1178, %v1133
    %1182 = vmatpush.msra.mxu0 %v1151
    %1183 = vmatpush.msra.mxu0 %v1150
    %1184 = vmatpush.msra.mxu0 %v1149
    %1185 = vmatpush.msra.mxu0 %v1148
    %1186 = vmatpush.msra.mxu0 %v1147
    %1187 = vmatpush.msra.mxu0 %v1146
    %1188 = vmatpush.msra.mxu0 %v1145
    %1189 = vmatpush.msra.mxu0 %v1144
    %1190 = vmatpush.msra.mxu0 %v1143
    %1191 = vmatpush.msra.mxu0 %v1142
    %1192 = vmatpush.msra.mxu0 %v1141
    %1193 = vmatpush.msra.mxu0 %v1140
    %1194 = vmatpush.msra.mxu0 %v1139
    %1195 = vmatpush.msra.mxu0 %v1138
    %1196 = vmatpush.msra.mxu0 %v1137
    %1197 = vmatpush.msra.mxu0 %v1136
    %1198 = vmatmul.f32.gmra.mxu0 %v1177
    %v1199 = vpop.f32.mrf.mxu0
    %v1200 = vadd.f32 %v1170, %v1199
    %1201 = vdwg.mxu0
    %1202 = vmatpush.msra.mxu0 %v1167
    %1203 = vmatpush.msra.mxu0 %v1166
    %1204 = vmatpush.msra.mxu0 %v1165
    %1205 = vmatpush.msra.mxu0 %v1164
    %1206 = vmatpush.msra.mxu0 %v1163
    %1207 = vmatpush.msra.mxu0 %v1162
    %1208 = vmatpush.msra.mxu0 %v1161
    %1209 = vmatpush.msra.mxu0 %v1160
    %1210 = vmatpush.msra.mxu0 %v1159
    %1211 = vmatpush.msra.mxu0 %v1158
    %1212 = vmatpush.msra.mxu0 %v1157
    %1213 = vmatpush.msra.mxu0 %v1156
    %1214 = vmatpush.msra.mxu0 %v1155
    %1215 = vmatpush.msra.mxu0 %v1154
    %1216 = vmatpush.msra.mxu0 %v1153
    %1217 = vmatpush.msra.mxu0 %v1152
    %1218 = vmatmul.f32.gmra.mxu0 %v1179
    %v1219 = vpop.f32.mrf.mxu0
    %v1220 = vadd.f32 %v1200, %v1219
    %1221 = vdwg.mxu0
    %1222 = vst [vmem:[#allocation7] sm:$0x3] %v1220
    // Predicated region
    $region34: #{tpu_custom_call.1} parent=1 // pred_check
      _
    $region35: #{tpu_custom_call.1} parent=1 // pred_check_branch
      %1224 = sbr.rel (0) target = $region37
    $region36: #{tpu_custom_call.1} parent=1 // pred_region
      %1226 = vsyncadd [#allocation4], 0
      %s1228 = sshll.u32 [#allocation7], 4
      %s1229 = int_to_ptr.vmem [resolvable:$true] %s1228
      %s1230 = sshll.u32 %s6, 4
      %s1231 = int_to_ptr.hbm [resolvable:$true] %s1230
      %1233 = dma.vmem_to_hbm [thread:$0]  %s1229, 32, %s1231, [#allocation4]
    $region37: #{tpu_custom_call.1} parent=1 // pred_fallthru
      _
    // Predicated region
    $region38: #{tpu_custom_call.1} parent=1 // pred_check
      _
    $region39: #{tpu_custom_call.1} parent=1 // pred_check_branch
      %1235 = sbr.rel (0) target = $region41
    $region40: #{tpu_custom_call.1} parent=1 // pred_region
      %1237 = dma.done [#allocation4], 32
    $region41: #{tpu_custom_call.1} parent=1 // pred_fallthru
      _
    %1238 = vsyncpa [#allocation3], 1
    %1239 = vsyncpa [#allocation6], 1
    %1240 = vsyncpa [#allocation4], 1

</llo_original>
